<compile_context>
chip_gen: v6e
topology: v6e:2x2x1
jax: 0.10.0
libtpu: 0.0.40
codegen_flags: <defaults>
</compile_context>

<pallas_src>
import functools

import jax
import jax.numpy as jnp
from jax.experimental import pallas as pl
from jax.experimental.pallas import tpu as pltpu

EPS = 1e-5


def _attention_gate_kernel(
    # inputs
    x_ref,      # (1, Cx, T)  current HW tile of x (channels on sublanes, HW on lanes)
    g_ref,      # (1, Cg, T)
    wx_ref,     # (Ct, Cx)    x-branch 1x1 conv weight (out, in)
    wg_ref,     # (Ct, Cg)    g-branch 1x1 conv weight
    wt_ref,     # (Ct, 1)     t-branch 1x1 conv weight as a column
    # outputs
    o_ref,      # (1, Cx, T)
    # scratch (persists across the grid; re-initialised per sample)
    sx_ref, ssx_ref,   # (Ct, 1) sum / sumsq of conv_x output over HW
    sg_ref, ssg_ref,   # (Ct, 1) sum / sumsq of conv_g output over HW
    st_ref, sst_ref,   # (1, 1)  sum / sumsq of the 1-channel t conv over HW
    zt_ref,            # (n_hw, 1, T) pre-norm t activations, buffered across passes
    *,
    hw: int,           # total spatial size H*W (static)
):
    p = pl.program_id(1)   # pass: 0 = x/g stats, 1 = normalize + t stats, 2 = gate
    h = pl.program_id(2)   # HW tile index
    inv_hw = 1.0 / float(hw)

    # 1x1 convs as (Ct, Cin) x (Cin, T) MXU matmuls; activations in input dtype,
    # accumulation in f32.  They are recomputed in pass 1 instead of buffered
    # (buffering would cost 2*Ct*HW*4 bytes of VMEM; recompute is a tiny matmul).
    def conv_x():
        return jnp.dot(wx_ref[...], x_ref[0], preferred_element_type=jnp.float32)

    def conv_g():
        return jnp.dot(wg_ref[...], g_ref[0], preferred_element_type=jnp.float32)

    # ---- per-sample init of the streamed-norm accumulators ----------------------
    @pl.when(jnp.logical_and(p == 0, h == 0))
    def _init():
        sx_ref[...] = jnp.zeros_like(sx_ref)
        ssx_ref[...] = jnp.zeros_like(ssx_ref)
        sg_ref[...] = jnp.zeros_like(sg_ref)
        ssg_ref[...] = jnp.zeros_like(ssg_ref)
        st_ref[...] = jnp.zeros_like(st_ref)
        sst_ref[...] = jnp.zeros_like(sst_ref)

    # ---- pass 0: accumulate per-channel instance-norm stats of conv_x / conv_g ----
    @pl.when(p == 0)
    def _stats():
        zx = conv_x()                                             # (Ct, T) f32
        zg = conv_g()
        sx_ref[...] += jnp.sum(zx, axis=1, keepdims=True)
        ssx_ref[...] += jnp.sum(zx * zx, axis=1, keepdims=True)
        sg_ref[...] += jnp.sum(zg, axis=1, keepdims=True)
        ssg_ref[...] += jnp.sum(zg * zg, axis=1, keepdims=True)

    # ---- pass 1: normalize, ReLU, t projection, accumulate t stats ---------------
    @pl.when(p == 1)
    def _t_proj():
        zx = conv_x()
        zg = conv_g()
        mx = sx_ref[...] * inv_hw
        vx = jnp.maximum(ssx_ref[...] * inv_hw - mx * mx, 0.0)
        mg = sg_ref[...] * inv_hw
        vg = jnp.maximum(ssg_ref[...] * inv_hw - mg * mg, 0.0)
        xn = (zx - mx) * jax.lax.rsqrt(vx + EPS)
        gn = (zg - mg) * jax.lax.rsqrt(vg + EPS)
        t_in = jnp.maximum(xn + gn, 0.0)                          # (Ct, T)
        # Single-output-channel projection: VPU multiply + sublane (XLU) reduce keeps
        # the result lane-dense and avoids an M=1, lane-sparse MXU matmul.
        wt_col = wt_ref[...].astype(jnp.float32)                  # (Ct, 1)
        zt = jnp.sum(t_in * wt_col, axis=0, keepdims=True)        # (1, T)
        zt_ref[h] = zt
        st_ref[...] += jnp.sum(zt, axis=1, keepdims=True)
        sst_ref[...] += jnp.sum(zt * zt, axis=1, keepdims=True)

    # ---- pass 2: normalize t, sigmoid, gate x -> output ---------------------------
    @pl.when(p == 2)
    def _gate():
        mt = st_ref[...] * inv_hw                                 # (1, 1)
        vt = jnp.maximum(sst_ref[...] * inv_hw - mt * mt, 0.0)
        att = jax.nn.sigmoid((zt_ref[h] - mt) * jax.lax.rsqrt(vt + EPS))   # (1, T)
        o_ref[0] = (x_ref[0].astype(jnp.float32) * att).astype(o_ref.dtype)


def _choose_hw_tile(hw, cx, cg, ct, vmem_budget_bytes):
    """Largest lane tile (multiple of 128, dividing HW) whose working set fits budget."""
    if hw <= 128:
        return hw
    # Rough f32 bytes live per lane column per grid step: double-buffered x/g/out
    # pipeline blocks + conv / norm intermediates of that column.
    per_col = 4 * (2 * (2 * cx + cg) + 4 * ct + cx + cg + 8)
    # zt scratch (sublane-padded) + weights + slack.
    fixed = 32 * hw + 4 * ct * (cx + cg + 2) + (1 << 18)
    cap = max(128, (vmem_budget_bytes - fixed) // per_col)
    cap = min(cap, hw)
    t = (cap // 128) * 128
    while t >= 128:
        if hw % t == 0:
            return t
        t -= 128
    if hw <= cap:          # HW not a multiple of 128 but small: one whole-HW tile.
        return hw
    # TODO(synk): masked ragged last tile for large HW that is not a multiple of 128.
    raise NotImplementedError("H*W must be a multiple of 128 (or fit in one tile)")


def attention_block(x_nchw, g_nchw, params, *, hw_tile=None,
                    vmem_budget_bytes=24 * 1024 * 1024):
    """UNet attention gate: x:(N,Cx,H,W), g:(N,Cg,H,W) -> (N,Cx,H,W)."""
    wx, bx, wg, bg, wt, bt = params
    del bx, bg, bt   # biases cancel under the affine-free InstanceNorm (see header)

    N, Cx, H, W = x_nchw.shape
    _, Cg, _, _ = g_nchw.shape
    Ct = wx.shape[0]
    HW = H * W

    # NCHW -> (N, C, HW): pure reshape, no transpose, no extra HBM round trip.
    x_flat = x_nchw.reshape(N, Cx, HW)
    g_flat = g_nchw.reshape(N, Cg, HW)
    wt_col = wt.reshape(Ct, 1)

    if hw_tile is None:
        t_hw = _choose_hw_tile(HW, Cx, Cg, Ct, vmem_budget_bytes)
    else:
        t_hw = hw_tile
        assert HW % t_hw == 0 and (t_hw % 128 == 0 or t_hw == HW), "bad hw_tile"
    n_hw = HW // t_hw

    kernel = functools.partial(_attention_gate_kernel, hw=HW)

    grid_spec = pltpu.PrefetchScalarGridSpec(
        num_scalar_prefetch=0,
        grid=(N, 3, n_hw),                 # sample (parallel) x pass x HW tile
        in_specs=[
            pl.BlockSpec((1, Cx, t_hw), lambda n, p, h: (n, 0, h)),
            # g is only needed in passes 0 and 1; park its window during pass 2 so it
            # is not re-fetched from HBM while gating.
            pl.BlockSpec((1, Cg, t_hw),
                         lambda n, p, h: (n, 0, jnp.where(p < 2, h, 0))),
            pl.BlockSpec((Ct, Cx), lambda n, p, h: (0, 0)),
            pl.BlockSpec((Ct, Cg), lambda n, p, h: (0, 0)),
            pl.BlockSpec((Ct, 1), lambda n, p, h: (0, 0)),
        ],
        # Output tiles are produced only in pass 2; park the output window on tile 0
        # during passes 0/1 so every block is written exactly once (lane-dense vst,
        # no garbage / redundant writebacks).
        out_specs=pl.BlockSpec((1, Cx, t_hw),
                               lambda n, p, h: (n, 0, jnp.where(p == 2, h, 0))),
        scratch_shapes=[
            pltpu.VMEM((Ct, 1), jnp.float32),       # sum   conv_x
            pltpu.VMEM((Ct, 1), jnp.float32),       # sumsq conv_x
            pltpu.VMEM((Ct, 1), jnp.float32),       # sum   conv_g
            pltpu.VMEM((Ct, 1), jnp.float32),       # sumsq conv_g
            pltpu.VMEM((1, 1), jnp.float32),        # sum   conv_t
            pltpu.VMEM((1, 1), jnp.float32),        # sumsq conv_t
            pltpu.VMEM((n_hw, 1, t_hw), jnp.float32),  # pre-norm t, kept across passes
        ],
    )

    out_flat = pl.pallas_call(
        kernel,
        out_shape=jax.ShapeDtypeStruct((N, Cx, HW), x_nchw.dtype),
        grid_spec=grid_spec,
        compiler_params=pltpu.CompilerParams(
            dimension_semantics=("parallel", "arbitrary", "arbitrary"),
            vmem_limit_bytes=48 * 1024 * 1024,      # explicit; safe on v7x (64 MiB)
        ),
    )(x_flat, g_flat, wx, wg, wt_col)

    return out_flat.reshape(N, Cx, H, W)


def reference_attention_block(x_nchw, g_nchw, params):
    """Pure-JAX reference (NCHW, with biases), same semantics as the PyTorch module."""
    wx, bx, wg, bg, wt, bt = params

    def conv1x1(v, w, b):                       # w: (Cout, Cin), PyTorch layout
        y = jnp.einsum("nchw,dc->ndhw", v, w)
        return y + b.reshape(1, -1, 1, 1)

    def inorm(v):                               # InstanceNorm2d(affine=False), eps=1e-5
        mu = jnp.mean(v, axis=(2, 3), keepdims=True)
        var = jnp.mean((v - mu) ** 2, axis=(2, 3), keepdims=True)
        return (v - mu) * jax.lax.rsqrt(var + EPS)

    x_out = inorm(conv1x1(x_nchw, wx, bx))
    g_out = inorm(conv1x1(g_nchw, wg, bg))
    t_in = jnp.maximum(x_out + g_out, 0.0)
    att = jax.nn.sigmoid(inorm(conv1x1(t_in, wt, bt)))
    return x_nchw * att


def init_params(key, in_channel_x, in_channel_g, channel_t):
    ks = jax.random.split(key, 6)
    # PyTorch 1x1 conv layout: weight (Cout, Cin), bias (Cout,).
    wx = jax.random.normal(ks[0], (channel_t, in_channel_x), jnp.float32) * 0.2
    bx = jax.random.normal(ks[1], (channel_t,), jnp.float32) * 0.1
    wg = jax.random.normal(ks[2], (channel_t, in_channel_g), jnp.float32) * 0.2
    bg = jax.random.normal(ks[3], (channel_t,), jnp.float32) * 0.1
    wt = jax.random.normal(ks[4], (1, channel_t), jnp.float32) * 0.2
    bt = jax.random.normal(ks[5], (1,), jnp.float32) * 0.1
    return wx, bx, wg, bg, wt, bt


if __name__ == "__main__":
    key = jax.random.PRNGKey(0)
    k_x, k_g, k_p = jax.random.split(key, 3)

    N, Cx, Cg, Ct, H, W = 2, 4, 6, 8, 16, 16
    x = jax.random.normal(k_x, (N, Cx, H, W), jnp.float32)
    g = jax.random.normal(k_g, (N, Cg, H, W), jnp.float32)
    params = init_params(k_p, Cx, Cg, Ct)

    # hw_tile=128 -> 2 HW tiles per sample, so the streamed (multi-tile) instance-norm
    # path and all three passes are exercised even at this small size.
    out = attention_block(x, g, params, hw_tile=128)
    out = jax.block_until_ready(out)

    ref = jax.block_until_ready(reference_attention_block(x, g, params))
    assert out.shape == (N, Cx, H, W)
    err = float(jnp.max(jnp.abs(out - ref)))
    assert jnp.allclose(out, ref, atol=1e-4, rtol=1e-4), f"mismatch vs reference: {err}"

    print("KERNEL_OK")
</pallas_src>

<mosaic_0001>
module attributes {stable_mosaic.version = 11 : i64} {
  func.func @_attention_gate_kernel(%arg0: i32, %arg1: i32, %arg2: i32, %arg3: memref<1x4x128xf32, #tpu.memory_space<vmem>>, %arg4: memref<1x6x128xf32, #tpu.memory_space<vmem>>, %arg5: memref<8x4xf32, #tpu.memory_space<vmem>>, %arg6: memref<8x6xf32, #tpu.memory_space<vmem>>, %arg7: memref<8x1xf32, #tpu.memory_space<vmem>>, %arg8: memref<1x4x128xf32, #tpu.memory_space<vmem>>, %arg9: memref<8x1xf32, #tpu.memory_space<vmem>>, %arg10: memref<8x1xf32, #tpu.memory_space<vmem>>, %arg11: memref<8x1xf32, #tpu.memory_space<vmem>>, %arg12: memref<8x1xf32, #tpu.memory_space<vmem>>, %arg13: memref<1x1xf32, #tpu.memory_space<vmem>>, %arg14: memref<1x1xf32, #tpu.memory_space<vmem>>, %arg15: memref<2x1x128xf32, #tpu.memory_space<vmem>>) attributes {dimension_semantics = [#tpu.dimension_semantics<parallel>, #tpu.dimension_semantics<arbitrary>, #tpu.dimension_semantics<arbitrary>], iteration_bounds = array<i64: 2, 3, 2>, scalar_prefetch = 0 : i64, scratch_operands = 7 : i64, tpu.core_type = #tpu.core_type<tc>, window_params = [{transform_indices = @transform_0, window_bounds = array<i64: 1, 4, 128>}, {transform_indices = @transform_1, window_bounds = array<i64: 1, 6, 128>}, {pipeline_mode = #tpu.pipeline_mode<synchronous>, transform_indices = @transform_2, window_bounds = array<i64: 8, 4>}, {pipeline_mode = #tpu.pipeline_mode<synchronous>, transform_indices = @transform_3, window_bounds = array<i64: 8, 6>}, {pipeline_mode = #tpu.pipeline_mode<synchronous>, transform_indices = @transform_4, window_bounds = array<i64: 8, 1>}, {transform_indices = @transform_5, window_bounds = array<i64: 1, 4, 128>}]} {
    %c0_i32 = arith.constant 0 : i32
    %0 = arith.cmpi eq, %arg1, %c0_i32 : i32
    %c0_i32_0 = arith.constant 0 : i32
    %1 = arith.cmpi eq, %arg2, %c0_i32_0 : i32
    %2 = arith.andi %0, %1 : i1
    %3 = arith.extui %2 : i1 to i32
    %c0_i32_1 = arith.constant 0 : i32
    %4 = arith.cmpi ne, %3, %c0_i32_1 : i32
    scf.if %4 {
      %cst = arith.constant 0.000000e+00 : f32
      %14 = vector.broadcast %cst : f32 to vector<8x1xf32>
      %c0 = arith.constant 0 : index
      %c0_6 = arith.constant 0 : index
      %15 = vector.load %arg9[%c0, %c0_6] : memref<8x1xf32, #tpu.memory_space<vmem>>, vector<8x1xf32>
      tpu.vector_store %arg9[%c0, %c0_6], %14 {strides = array<i32>} : memref<8x1xf32, #tpu.memory_space<vmem>>, vector<8x1xf32>,
      %cst_7 = arith.constant 0.000000e+00 : f32
      %16 = vector.broadcast %cst_7 : f32 to vector<8x1xf32>
      %c0_8 = arith.constant 0 : index
      %c0_9 = arith.constant 0 : index
      %17 = vector.load %arg10[%c0_8, %c0_9] : memref<8x1xf32, #tpu.memory_space<vmem>>, vector<8x1xf32>
      tpu.vector_store %arg10[%c0_8, %c0_9], %16 {strides = array<i32>} : memref<8x1xf32, #tpu.memory_space<vmem>>, vector<8x1xf32>,
      %cst_10 = arith.constant 0.000000e+00 : f32
      %18 = vector.broadcast %cst_10 : f32 to vector<8x1xf32>
      %c0_11 = arith.constant 0 : index
      %c0_12 = arith.constant 0 : index
      %19 = vector.load %arg11[%c0_11, %c0_12] : memref<8x1xf32, #tpu.memory_space<vmem>>, vector<8x1xf32>
      tpu.vector_store %arg11[%c0_11, %c0_12], %18 {strides = array<i32>} : memref<8x1xf32, #tpu.memory_space<vmem>>, vector<8x1xf32>,
      %cst_13 = arith.constant 0.000000e+00 : f32
      %20 = vector.broadcast %cst_13 : f32 to vector<8x1xf32>
      %c0_14 = arith.constant 0 : index
      %c0_15 = arith.constant 0 : index
      %21 = vector.load %arg12[%c0_14, %c0_15] : memref<8x1xf32, #tpu.memory_space<vmem>>, vector<8x1xf32>
      tpu.vector_store %arg12[%c0_14, %c0_15], %20 {strides = array<i32>} : memref<8x1xf32, #tpu.memory_space<vmem>>, vector<8x1xf32>,
      %cst_16 = arith.constant 0.000000e+00 : f32
      %22 = vector.broadcast %cst_16 : f32 to vector<1x1xf32>
      %c0_17 = arith.constant 0 : index
      %c0_18 = arith.constant 0 : index
      %23 = vector.load %arg13[%c0_17, %c0_18] : memref<1x1xf32, #tpu.memory_space<vmem>>, vector<1x1xf32>
      tpu.vector_store %arg13[%c0_17, %c0_18], %22 {strides = array<i32>} : memref<1x1xf32, #tpu.memory_space<vmem>>, vector<1x1xf32>,
      %cst_19 = arith.constant 0.000000e+00 : f32
      %24 = vector.broadcast %cst_19 : f32 to vector<1x1xf32>
      %c0_20 = arith.constant 0 : index
      %c0_21 = arith.constant 0 : index
      %25 = vector.load %arg14[%c0_20, %c0_21] : memref<1x1xf32, #tpu.memory_space<vmem>>, vector<1x1xf32>
      tpu.vector_store %arg14[%c0_20, %c0_21], %24 {strides = array<i32>} : memref<1x1xf32, #tpu.memory_space<vmem>>, vector<1x1xf32>,
    } else {
    }
    %c0_i32_2 = arith.constant 0 : i32
    %5 = arith.cmpi eq, %arg1, %c0_i32_2 : i32
    %6 = arith.extui %5 : i1 to i32
    %c0_i32_3 = arith.constant 0 : i32
    %7 = arith.cmpi ne, %6, %c0_i32_3 : i32
    scf.if %7 {
      %c0 = arith.constant 0 : index
      %c0_6 = arith.constant 0 : index
      %14 = vector.load %arg5[%c0, %c0_6] : memref<8x4xf32, #tpu.memory_space<vmem>>, vector<8x4xf32>
      %c0_7 = arith.constant 0 : index
      %c0_8 = arith.constant 0 : index
      %c0_9 = arith.constant 0 : index
      %15 = vector.load %arg3[%c0_7, %c0_8, %c0_9] : memref<1x4x128xf32, #tpu.memory_space<vmem>>, vector<1x4x128xf32>
      %16 = vector.shape_cast %15 : vector<1x4x128xf32> to vector<4x128xf32>
      %cst = arith.constant dense<0.000000e+00> : vector<8x128xf32>
      %17 = tpu.matmul %14, %16, %cst {dimension_numbers = #tpu.dot_dimension_numbers<[1], [0], [0], [1], [0, 0, 1, 1], [], []>} : vector<8x4xf32>, vector<4x128xf32>, vector<8x128xf32> -> vector<8x128xf32>
      %c0_10 = arith.constant 0 : index
      %c0_11 = arith.constant 0 : index
      %18 = vector.load %arg6[%c0_10, %c0_11] : memref<8x6xf32, #tpu.memory_space<vmem>>, vector<8x6xf32>
      %c0_12 = arith.constant 0 : index
      %c0_13 = arith.constant 0 : index
      %c0_14 = arith.constant 0 : index
      %19 = vector.load %arg4[%c0_12, %c0_13, %c0_14] : memref<1x6x128xf32, #tpu.memory_space<vmem>>, vector<1x6x128xf32>
      %20 = vector.shape_cast %19 : vector<1x6x128xf32> to vector<6x128xf32>
      %cst_15 = arith.constant dense<0.000000e+00> : vector<8x128xf32>
      %21 = tpu.matmul %18, %20, %cst_15 {dimension_numbers = #tpu.dot_dimension_numbers<[1], [0], [0], [1], [0, 0, 1, 1], [], []>} : vector<8x6xf32>, vector<6x128xf32>, vector<8x128xf32> -> vector<8x128xf32>
      %c0_16 = arith.constant 0 : index
      %c0_17 = arith.constant 0 : index
      %22 = vector.load %arg9[%c0_16, %c0_17] : memref<8x1xf32, #tpu.memory_space<vmem>>, vector<8x1xf32>
      %cst_18 = arith.constant dense<0.000000e+00> : vector<8xf32>
      %23 = vector.multi_reduction <add>, %17, %cst_18 [1] : vector<8x128xf32> to vector<8xf32>
      %24 = vector.shape_cast %23 : vector<8xf32> to vector<8x1xf32>
      %25 = arith.addf %22, %24 : vector<8x1xf32>
      %c0_19 = arith.constant 0 : index
      %c0_20 = arith.constant 0 : index
      %26 = vector.load %arg9[%c0_19, %c0_20] : memref<8x1xf32, #tpu.memory_space<vmem>>, vector<8x1xf32>
      tpu.vector_store %arg9[%c0_19, %c0_20], %25 {strides = array<i32>} : memref<8x1xf32, #tpu.memory_space<vmem>>, vector<8x1xf32>,
      %c0_21 = arith.constant 0 : index
      %c0_22 = arith.constant 0 : index
      %27 = vector.load %arg10[%c0_21, %c0_22] : memref<8x1xf32, #tpu.memory_space<vmem>>, vector<8x1xf32>
      %28 = arith.mulf %17, %17 : vector<8x128xf32>
      %cst_23 = arith.constant dense<0.000000e+00> : vector<8xf32>
      %29 = vector.multi_reduction <add>, %28, %cst_23 [1] : vector<8x128xf32> to vector<8xf32>
      %30 = vector.shape_cast %29 : vector<8xf32> to vector<8x1xf32>
      %31 = arith.addf %27, %30 : vector<8x1xf32>
      %c0_24 = arith.constant 0 : index
      %c0_25 = arith.constant 0 : index
      %32 = vector.load %arg10[%c0_24, %c0_25] : memref<8x1xf32, #tpu.memory_space<vmem>>, vector<8x1xf32>
      tpu.vector_store %arg10[%c0_24, %c0_25], %31 {strides = array<i32>} : memref<8x1xf32, #tpu.memory_space<vmem>>, vector<8x1xf32>,
      %c0_26 = arith.constant 0 : index
      %c0_27 = arith.constant 0 : index
      %33 = vector.load %arg11[%c0_26, %c0_27] : memref<8x1xf32, #tpu.memory_space<vmem>>, vector<8x1xf32>
      %cst_28 = arith.constant dense<0.000000e+00> : vector<8xf32>
      %34 = vector.multi_reduction <add>, %21, %cst_28 [1] : vector<8x128xf32> to vector<8xf32>
      %35 = vector.shape_cast %34 : vector<8xf32> to vector<8x1xf32>
      %36 = arith.addf %33, %35 : vector<8x1xf32>
      %c0_29 = arith.constant 0 : index
      %c0_30 = arith.constant 0 : index
      %37 = vector.load %arg11[%c0_29, %c0_30] : memref<8x1xf32, #tpu.memory_space<vmem>>, vector<8x1xf32>
      tpu.vector_store %arg11[%c0_29, %c0_30], %36 {strides = array<i32>} : memref<8x1xf32, #tpu.memory_space<vmem>>, vector<8x1xf32>,
      %c0_31 = arith.constant 0 : index
      %c0_32 = arith.constant 0 : index
      %38 = vector.load %arg12[%c0_31, %c0_32] : memref<8x1xf32, #tpu.memory_space<vmem>>, vector<8x1xf32>
      %39 = arith.mulf %21, %21 : vector<8x128xf32>
      %cst_33 = arith.constant dense<0.000000e+00> : vector<8xf32>
      %40 = vector.multi_reduction <add>, %39, %cst_33 [1] : vector<8x128xf32> to vector<8xf32>
      %41 = vector.shape_cast %40 : vector<8xf32> to vector<8x1xf32>
      %42 = arith.addf %38, %41 : vector<8x1xf32>
      %c0_34 = arith.constant 0 : index
      %c0_35 = arith.constant 0 : index
      %43 = vector.load %arg12[%c0_34, %c0_35] : memref<8x1xf32, #tpu.memory_space<vmem>>, vector<8x1xf32>
      tpu.vector_store %arg12[%c0_34, %c0_35], %42 {strides = array<i32>} : memref<8x1xf32, #tpu.memory_space<vmem>>, vector<8x1xf32>,
    } else {
    }
    %c1_i32 = arith.constant 1 : i32
    %8 = arith.cmpi eq, %arg1, %c1_i32 : i32
    %9 = arith.extui %8 : i1 to i32
    %c0_i32_4 = arith.constant 0 : i32
    %10 = arith.cmpi ne, %9, %c0_i32_4 : i32
    scf.if %10 {
      %c0 = arith.constant 0 : index
      %c0_6 = arith.constant 0 : index
      %14 = vector.load %arg5[%c0, %c0_6] : memref<8x4xf32, #tpu.memory_space<vmem>>, vector<8x4xf32>
      %c0_7 = arith.constant 0 : index
      %c0_8 = arith.constant 0 : index
      %c0_9 = arith.constant 0 : index
      %15 = vector.load %arg3[%c0_7, %c0_8, %c0_9] : memref<1x4x128xf32, #tpu.memory_space<vmem>>, vector<1x4x128xf32>
      %16 = vector.shape_cast %15 : vector<1x4x128xf32> to vector<4x128xf32>
      %cst = arith.constant dense<0.000000e+00> : vector<8x128xf32>
      %17 = tpu.matmul %14, %16, %cst {dimension_numbers = #tpu.dot_dimension_numbers<[1], [0], [0], [1], [0, 0, 1, 1], [], []>} : vector<8x4xf32>, vector<4x128xf32>, vector<8x128xf32> -> vector<8x128xf32>
      %c0_10 = arith.constant 0 : index
      %c0_11 = arith.constant 0 : index
      %18 = vector.load %arg6[%c0_10, %c0_11] : memref<8x6xf32, #tpu.memory_space<vmem>>, vector<8x6xf32>
      %c0_12 = arith.constant 0 : index
      %c0_13 = arith.constant 0 : index
      %c0_14 = arith.constant 0 : index
      %19 = vector.load %arg4[%c0_12, %c0_13, %c0_14] : memref<1x6x128xf32, #tpu.memory_space<vmem>>, vector<1x6x128xf32>
      %20 = vector.shape_cast %19 : vector<1x6x128xf32> to vector<6x128xf32>
      %cst_15 = arith.constant dense<0.000000e+00> : vector<8x128xf32>
      %21 = tpu.matmul %18, %20, %cst_15 {dimension_numbers = #tpu.dot_dimension_numbers<[1], [0], [0], [1], [0, 0, 1, 1], [], []>} : vector<8x6xf32>, vector<6x128xf32>, vector<8x128xf32> -> vector<8x128xf32>
      %c0_16 = arith.constant 0 : index
      %c0_17 = arith.constant 0 : index
      %22 = vector.load %arg9[%c0_16, %c0_17] : memref<8x1xf32, #tpu.memory_space<vmem>>, vector<8x1xf32>
      %cst_18 = arith.constant 3.906250e-03 : f32
      %23 = vector.broadcast %cst_18 : f32 to vector<8x1xf32>
      %24 = arith.mulf %22, %23 : vector<8x1xf32>
      %c0_19 = arith.constant 0 : index
      %c0_20 = arith.constant 0 : index
      %25 = vector.load %arg10[%c0_19, %c0_20] : memref<8x1xf32, #tpu.memory_space<vmem>>, vector<8x1xf32>
      %cst_21 = arith.constant 3.906250e-03 : f32
      %26 = vector.broadcast %cst_21 : f32 to vector<8x1xf32>
      %27 = arith.mulf %25, %26 : vector<8x1xf32>
      %28 = arith.mulf %24, %24 : vector<8x1xf32>
      %29 = arith.subf %27, %28 : vector<8x1xf32>
      %cst_22 = arith.constant 0.000000e+00 : f32
      %30 = vector.broadcast %cst_22 : f32 to vector<8x1xf32>
      %31 = arith.maximumf %29, %30 : vector<8x1xf32>
      %c0_23 = arith.constant 0 : index
      %c0_24 = arith.constant 0 : index
      %32 = vector.load %arg11[%c0_23, %c0_24] : memref<8x1xf32, #tpu.memory_space<vmem>>, vector<8x1xf32>
      %cst_25 = arith.constant 3.906250e-03 : f32
      %33 = vector.broadcast %cst_25 : f32 to vector<8x1xf32>
      %34 = arith.mulf %32, %33 : vector<8x1xf32>
      %c0_26 = arith.constant 0 : index
      %c0_27 = arith.constant 0 : index
      %35 = vector.load %arg12[%c0_26, %c0_27] : memref<8x1xf32, #tpu.memory_space<vmem>>, vector<8x1xf32>
      %cst_28 = arith.constant 3.906250e-03 : f32
      %36 = vector.broadcast %cst_28 : f32 to vector<8x1xf32>
      %37 = arith.mulf %35, %36 : vector<8x1xf32>
      %38 = arith.mulf %34, %34 : vector<8x1xf32>
      %39 = arith.subf %37, %38 : vector<8x1xf32>
      %cst_29 = arith.constant 0.000000e+00 : f32
      %40 = vector.broadcast %cst_29 : f32 to vector<8x1xf32>
      %41 = arith.maximumf %39, %40 : vector<8x1xf32>
      %42 = vector.broadcast %24 : vector<8x1xf32> to vector<8x128xf32>
      %43 = arith.subf %17, %42 : vector<8x128xf32>
      %cst_30 = arith.constant 9.99999974E-6 : f32
      %44 = vector.broadcast %cst_30 : f32 to vector<8x1xf32>
      %45 = arith.addf %31, %44 : vector<8x1xf32>
      %46 = math.rsqrt %45 : vector<8x1xf32>
      %47 = vector.broadcast %46 : vector<8x1xf32> to vector<8x128xf32>
      %48 = arith.mulf %43, %47 : vector<8x128xf32>
      %49 = vector.broadcast %34 : vector<8x1xf32> to vector<8x128xf32>
      %50 = arith.subf %21, %49 : vector<8x128xf32>
      %cst_31 = arith.constant 9.99999974E-6 : f32
      %51 = vector.broadcast %cst_31 : f32 to vector<8x1xf32>
      %52 = arith.addf %41, %51 : vector<8x1xf32>
      %53 = math.rsqrt %52 : vector<8x1xf32>
      %54 = vector.broadcast %53 : vector<8x1xf32> to vector<8x128xf32>
      %55 = arith.mulf %50, %54 : vector<8x128xf32>
      %56 = arith.addf %48, %55 : vector<8x128xf32>
      %cst_32 = arith.constant 0.000000e+00 : f32
      %57 = vector.broadcast %cst_32 : f32 to vector<8x128xf32>
      %58 = arith.maximumf %56, %57 : vector<8x128xf32>
      %c0_33 = arith.constant 0 : index
      %c0_34 = arith.constant 0 : index
      %59 = vector.load %arg7[%c0_33, %c0_34] : memref<8x1xf32, #tpu.memory_space<vmem>>, vector<8x1xf32>
      %60 = vector.broadcast %59 : vector<8x1xf32> to vector<8x128xf32>
      %61 = arith.mulf %58, %60 : vector<8x128xf32>
      %cst_35 = arith.constant dense<0.000000e+00> : vector<128xf32>
      %62 = vector.multi_reduction <add>, %61, %cst_35 [0] : vector<8x128xf32> to vector<128xf32>
      %63 = vector.shape_cast %62 : vector<128xf32> to vector<1x128xf32>
      %64 = arith.index_cast %arg2 : i32 to index
      %c0_36 = arith.constant 0 : index
      %c0_37 = arith.constant 0 : index
      %65 = vector.load %arg15[%64, %c0_36, %c0_37] : memref<2x1x128xf32, #tpu.memory_space<vmem>>, vector<1x1x128xf32>
      %66 = vector.shape_cast %65 : vector<1x1x128xf32> to vector<1x128xf32>
      %67 = vector.shape_cast %63 : vector<1x128xf32> to vector<1x1x128xf32>
      tpu.vector_store %arg15[%64, %c0_36, %c0_37], %67 {strides = array<i32>} : memref<2x1x128xf32, #tpu.memory_space<vmem>>, vector<1x1x128xf32>,
      %c0_38 = arith.constant 0 : index
      %c0_39 = arith.constant 0 : index
      %68 = vector.load %arg13[%c0_38, %c0_39] : memref<1x1xf32, #tpu.memory_space<vmem>>, vector<1x1xf32>
      %cst_40 = arith.constant dense<0.000000e+00> : vector<1xf32>
      %69 = vector.multi_reduction <add>, %63, %cst_40 [1] : vector<1x128xf32> to vector<1xf32>
      %70 = vector.shape_cast %69 : vector<1xf32> to vector<1x1xf32>
      %71 = arith.addf %68, %70 : vector<1x1xf32>
      %c0_41 = arith.constant 0 : index
      %c0_42 = arith.constant 0 : index
      %72 = vector.load %arg13[%c0_41, %c0_42] : memref<1x1xf32, #tpu.memory_space<vmem>>, vector<1x1xf32>
      tpu.vector_store %arg13[%c0_41, %c0_42], %71 {strides = array<i32>} : memref<1x1xf32, #tpu.memory_space<vmem>>, vector<1x1xf32>,
      %c0_43 = arith.constant 0 : index
      %c0_44 = arith.constant 0 : index
      %73 = vector.load %arg14[%c0_43, %c0_44] : memref<1x1xf32, #tpu.memory_space<vmem>>, vector<1x1xf32>
      %74 = arith.mulf %63, %63 : vector<1x128xf32>
      %cst_45 = arith.constant dense<0.000000e+00> : vector<1xf32>
      %75 = vector.multi_reduction <add>, %74, %cst_45 [1] : vector<1x128xf32> to vector<1xf32>
      %76 = vector.shape_cast %75 : vector<1xf32> to vector<1x1xf32>
      %77 = arith.addf %73, %76 : vector<1x1xf32>
      %c0_46 = arith.constant 0 : index
      %c0_47 = arith.constant 0 : index
      %78 = vector.load %arg14[%c0_46, %c0_47] : memref<1x1xf32, #tpu.memory_space<vmem>>, vector<1x1xf32>
      tpu.vector_store %arg14[%c0_46, %c0_47], %77 {strides = array<i32>} : memref<1x1xf32, #tpu.memory_space<vmem>>, vector<1x1xf32>,
    } else {
    }
    %c2_i32 = arith.constant 2 : i32
    %11 = arith.cmpi eq, %arg1, %c2_i32 : i32
    %12 = arith.extui %11 : i1 to i32
    %c0_i32_5 = arith.constant 0 : i32
    %13 = arith.cmpi ne, %12, %c0_i32_5 : i32
    scf.if %13 {
      %c0 = arith.constant 0 : index
      %c0_6 = arith.constant 0 : index
      %14 = vector.load %arg13[%c0, %c0_6] : memref<1x1xf32, #tpu.memory_space<vmem>>, vector<1x1xf32>
      %cst = arith.constant 3.906250e-03 : f32
      %15 = vector.broadcast %cst : f32 to vector<1x1xf32>
      %16 = arith.mulf %14, %15 : vector<1x1xf32>
      %c0_7 = arith.constant 0 : index
      %c0_8 = arith.constant 0 : index
      %17 = vector.load %arg14[%c0_7, %c0_8] : memref<1x1xf32, #tpu.memory_space<vmem>>, vector<1x1xf32>
      %cst_9 = arith.constant 3.906250e-03 : f32
      %18 = vector.broadcast %cst_9 : f32 to vector<1x1xf32>
      %19 = arith.mulf %17, %18 : vector<1x1xf32>
      %20 = arith.mulf %16, %16 : vector<1x1xf32>
      %21 = arith.subf %19, %20 : vector<1x1xf32>
      %cst_10 = arith.constant 0.000000e+00 : f32
      %22 = vector.broadcast %cst_10 : f32 to vector<1x1xf32>
      %23 = arith.maximumf %21, %22 : vector<1x1xf32>
      %24 = arith.index_cast %arg2 : i32 to index
      %c0_11 = arith.constant 0 : index
      %c0_12 = arith.constant 0 : index
      %25 = vector.load %arg15[%24, %c0_11, %c0_12] : memref<2x1x128xf32, #tpu.memory_space<vmem>>, vector<1x1x128xf32>
      %26 = vector.shape_cast %25 : vector<1x1x128xf32> to vector<1x128xf32>
      %27 = vector.broadcast %16 : vector<1x1xf32> to vector<1x128xf32>
      %28 = arith.subf %26, %27 : vector<1x128xf32>
      %cst_13 = arith.constant 9.99999974E-6 : f32
      %29 = vector.broadcast %cst_13 : f32 to vector<1x1xf32>
      %30 = arith.addf %23, %29 : vector<1x1xf32>
      %31 = math.rsqrt %30 : vector<1x1xf32>
      %32 = vector.broadcast %31 : vector<1x1xf32> to vector<1x128xf32>
      %33 = arith.mulf %28, %32 : vector<1x128xf32>
      %34 = arith.negf %33 : vector<1x128xf32>
      %35 = math.exp %34 : vector<1x128xf32>
      %cst_14 = arith.constant 1.000000e+00 : f32
      %36 = vector.broadcast %cst_14 : f32 to vector<1x128xf32>
      %37 = arith.addf %36, %35 : vector<1x128xf32>
      %38 = arith.divf %36, %37 : vector<1x128xf32>
      %c0_15 = arith.constant 0 : index
      %c0_16 = arith.constant 0 : index
      %c0_17 = arith.constant 0 : index
      %39 = vector.load %arg3[%c0_15, %c0_16, %c0_17] : memref<1x4x128xf32, #tpu.memory_space<vmem>>, vector<1x4x128xf32>
      %40 = vector.shape_cast %39 : vector<1x4x128xf32> to vector<4x128xf32>
      %41 = vector.broadcast %38 : vector<1x128xf32> to vector<4x128xf32>
      %42 = arith.mulf %40, %41 : vector<4x128xf32>
      %c0_18 = arith.constant 0 : index
      %c0_19 = arith.constant 0 : index
      %c0_20 = arith.constant 0 : index
      %43 = vector.load %arg8[%c0_18, %c0_19, %c0_20] : memref<1x4x128xf32, #tpu.memory_space<vmem>>, vector<1x4x128xf32>
      %44 = vector.shape_cast %43 : vector<1x4x128xf32> to vector<4x128xf32>
      %45 = vector.shape_cast %42 : vector<4x128xf32> to vector<1x4x128xf32>
      tpu.vector_store %arg8[%c0_18, %c0_19, %c0_20], %45 {strides = array<i32>} : memref<1x4x128xf32, #tpu.memory_space<vmem>>, vector<1x4x128xf32>,
    } else {
    }
    return
  }
  func.func @transform_0(%arg0: i32, %arg1: i32, %arg2: i32) -> (i32, i32, i32) {
    %c0_i32 = arith.constant 0 : i32
    %c0_i32_0 = arith.constant 0 : i32
    return %arg0, %c0_i32, %arg2 : i32, i32, i32
  }
  func.func @transform_1(%arg0: i32, %arg1: i32, %arg2: i32) -> (i32, i32, i32) {
    %c2_i32 = arith.constant 2 : i32
    %0 = arith.cmpi slt, %arg1, %c2_i32 : i32
    %c0_i32 = arith.constant 0 : i32
    %1 = arith.select %0, %arg2, %c0_i32 : i32
    %c0_i32_0 = arith.constant 0 : i32
    %c0_i32_1 = arith.constant 0 : i32
    return %arg0, %c0_i32_0, %1 : i32, i32, i32
  }
  func.func @transform_2(%arg0: i32, %arg1: i32, %arg2: i32) -> (i32, i32) {
    %c0_i32 = arith.constant 0 : i32
    %c0_i32_0 = arith.constant 0 : i32
    %c0_i32_1 = arith.constant 0 : i32
    return %c0_i32, %c0_i32_0 : i32, i32
  }
  func.func @transform_3(%arg0: i32, %arg1: i32, %arg2: i32) -> (i32, i32) {
    %c0_i32 = arith.constant 0 : i32
    %c0_i32_0 = arith.constant 0 : i32
    %c0_i32_1 = arith.constant 0 : i32
    return %c0_i32, %c0_i32_0 : i32, i32
  }
  func.func @transform_4(%arg0: i32, %arg1: i32, %arg2: i32) -> (i32, i32) {
    %c0_i32 = arith.constant 0 : i32
    %c0_i32_0 = arith.constant 0 : i32
    %c0_i32_1 = arith.constant 0 : i32
    return %c0_i32, %c0_i32_0 : i32, i32
  }
  func.func @transform_5(%arg0: i32, %arg1: i32, %arg2: i32) -> (i32, i32, i32) {
    %c2_i32 = arith.constant 2 : i32
    %0 = arith.cmpi eq, %arg1, %c2_i32 : i32
    %c0_i32 = arith.constant 0 : i32
    %1 = arith.select %0, %arg2, %c0_i32 : i32
    %c0_i32_0 = arith.constant 0 : i32
    %c0_i32_1 = arith.constant 0 : i32
    return %arg0, %c0_i32_0, %1 : i32, i32, i32
  }
}

</mosaic_0001>

<llo_original>
// kernel: tpu_custom_call.1
$region0: #{tpu_custom_call.1}
  #allocation0 [shape = 'u32[]', space=smem, size = 0x4, offset = 0x4, fixed_abs, tag = 'smem constant byte address 0x4 - core index']
  #allocation1 [shape = 'u32[144,128]{1,0:T(1,128)}', space=vmem, size = 0x12000, scoped, tag = 'internal scratch']
  #allocation2 [shape = 'f32[8,1]{1,0:T(8,128)}', space=vmem, size = 0x1000, scoped, tag = 'scratch operand']
  #allocation3 [shape = 'f32[8,1]{1,0:T(8,128)}', space=vmem, size = 0x1000, scoped, tag = 'scratch operand']
  #allocation4 [shape = 'f32[8,1]{1,0:T(8,128)}', space=vmem, size = 0x1000, scoped, tag = 'scratch operand']
  #allocation5 [shape = 'f32[8,1]{1,0:T(8,128)}', space=vmem, size = 0x1000, scoped, tag = 'scratch operand']
  #allocation6 [shape = 'f32[1,1]{1,0:T(1,128)}', space=vmem, size = 0x200, scoped, tag = 'scratch operand']
  #allocation7 [shape = 'f32[1,1]{1,0:T(1,128)}', space=vmem, size = 0x200, scoped, tag = 'scratch operand']
  #allocation8 [shape = 'f32[2,1,128]{2,1,0:T(1,128)}', space=vmem, size = 0x400, scoped, tag = 'scratch operand']
  %s0 = inlined_call_operand.vmem [shape: f32[2,4,256], index: 0, kind: input, shape index: {}]
  %s1 = inlined_call_operand.vmem [shape: f32[2,6,256], index: 1, kind: input, shape index: {}]
  %s2 = inlined_call_operand.vmem [shape: f32[8,4], index: 2, kind: input, shape index: {}]
  %s3 = inlined_call_operand.vmem [shape: f32[8,6], index: 3, kind: input, shape index: {}]
  %s4 = inlined_call_operand.vmem [shape: f32[8,1], index: 4, kind: input, shape index: {}]
  %s5 = inlined_call_operand.hbm [shape: f32[2,4,256], index: 5, kind: output, shape index: {}]
  %s6 = sld [smem:[#allocation0]]
  $region69: #{tpu_custom_call.1} parent=0
    _
  %s8 = ssub.s32 1, %s6
  %s9 = scalar_select 0, %s8, %s6
  $region1: #{tpu_custom_call.1} parent=0
    #allocation9 [shape = 'u8[4096]{0}', space=vmem, size = 0x1000, scoped, tag = 'output window, operand 0']
    #allocation10 [shape = 's32[2]{0}', space=sflag, size = 0x8, scoped, tag = 'scoped memory for tpu_custom_call.1']
    %10 = vsyncpa [#allocation10], 0
    %s11 = scalar_lea.sflag [#allocation10], 1
    %12 = vsyncpa %s11, 0
    loop: start=0, step=1, limit=14
    $region2: #{tpu_custom_call.1} parent=1 // loop_pre_header
      _
    $region3: #{tpu_custom_call.1} parent=1 // loop_header
      %s14 = sphi 0, %s18
      %p15 = scmp.ge.s32.totalorder %s14, 14
      %s21 = sphi 0, %s40
      %s22 = sphi 0, %s36
      %s23 = sphi 0, %s32
      %s24 = sphi 0, %s21
      %s25 = sphi 0, %s22
      %s26 = sphi 0, %s23
      %s27 = sphi 0, %s24
      %s28 = sphi 0, %s25
      %s29 = sphi 0, %s26
      %s45 = sphi 0, %s47
      %s48 = sphi 0, %s45
      %s49 = sphi 0, %s48
      %s65 = sphi 0, %s49
      %s77 = sphi 0, %s79
      %s80 = sphi 0, %s77
      %s81 = sphi 0, %s80
      %s97 = sphi 0, %s81
      %s101 = sphi 0, %s101
      %s103 = sphi 0, %s101
      %s104 = sphi 0, %s103
      %s118 = sphi 0, %s104
      %s122 = sphi 0, %s122
      %s124 = sphi 0, %s122
      %s125 = sphi 0, %s124
      %s139 = sphi 0, %s125
      %s143 = sphi 0, %s143
      %s145 = sphi 0, %s143
      %s146 = sphi 0, %s145
      %s160 = sphi 0, %s146
      %s172 = sphi 0, %s174
      %s175 = sphi 0, %s172
      %s176 = sphi 0, %s175
      %s192 = sphi 0, %s176
    $region4: #{tpu_custom_call.1} parent=1 // loop_header_branch
      %17 = sbr.rel (%p15) target = $region8
    $region5: #{tpu_custom_call.1} parent=1 // loop_body
      %s19 = ssub.s32 %s14, 1
      %s20 = ssub.s32 %s14, 2
      %s30 = sadd.s32 1, %s23
      %p31 = scmp.ge.s32.totalorder %s30, 2
      %s32 = scalar_select %p31, 0, %s30
      %s33 = sadd.s32 1, %s22
      %s34 = scalar_select %p31, %s33, %s22
      %p35 = scmp.ge.s32.totalorder %s34, 3
      %s36 = scalar_select %p35, 0, %s34
      %s37 = sadd.s32 1, %s21
      %s38 = scalar_select %p35, %s37, %s21
      %p39 = scmp.ge.s32.totalorder %s38, 2
      %s40 = scalar_select %p39, 0, %s38
      %s41 = ssub.s32 %s21, %s40
      %s42 = ssub.s32 %s23, %s32
      %s43 = sor.u32 %s41, %s42
      %p44 = scmp.eq.s32.totalorder %s43, 0
      %s46 = sadd.s32 %s45, 1
      %s47 = scalar_select %p44, %s45, %s46
      %p50 = pneg %p44
      %p51 = scmp.eq.s32.totalorder %s14, 11
      %p52 = por %p50, %p51
      %p53 = scmp.ne.s32.totalorder %s45, %s48
      %p54 = scmp.eq.s32.totalorder %s14, 0
      %p55 = por %p53, %p54
      %p56 = scmp.ne.s32.totalorder %s45, %s48
      %p57 = scmp.eq.s32.totalorder %s19, 11
      %p58 = por %p56, %p57
      %p59 = scmp.ne.s32.totalorder %s48, %s49
      %p60 = scmp.eq.s32.totalorder %s19, 0
      %p61 = por %p59, %p60
      %p62 = scmp.ne.s32.totalorder %s48, %s49
      %p63 = scmp.eq.s32.totalorder %s20, 11
      %p64 = por %p62, %p63
      %p66 = scmp.ne.s32.totalorder %s49, %s65
      %p67 = scmp.eq.s32.totalorder %s20, 0
      %p68 = por %p66, %p67
      %p69 = scmp.lt.s32.totalorder %s22, 2
      %s70 = scalar_select %p69, %s23, 0
      %p71 = scmp.lt.s32.totalorder %s36, 2
      %s72 = scalar_select %p71, %s32, 0
      %s73 = ssub.s32 %s21, %s40
      %s74 = ssub.s32 %s70, %s72
      %s75 = sor.u32 %s73, %s74
      %p76 = scmp.eq.s32.totalorder %s75, 0
      %s78 = sadd.s32 %s77, 1
      %s79 = scalar_select %p76, %s77, %s78
      %p82 = pneg %p76
      %p83 = scmp.eq.s32.totalorder %s14, 11
      %p84 = por %p82, %p83
      %p85 = scmp.ne.s32.totalorder %s77, %s80
      %p86 = scmp.eq.s32.totalorder %s14, 0
      %p87 = por %p85, %p86
      %p88 = scmp.ne.s32.totalorder %s77, %s80
      %p89 = scmp.eq.s32.totalorder %s19, 11
      %p90 = por %p88, %p89
      %p91 = scmp.ne.s32.totalorder %s80, %s81
      %p92 = scmp.eq.s32.totalorder %s19, 0
      %p93 = por %p91, %p92
      %p94 = scmp.ne.s32.totalorder %s80, %s81
      %p95 = scmp.eq.s32.totalorder %s20, 11
      %p96 = por %p94, %p95
      %p98 = scmp.ne.s32.totalorder %s81, %s97
      %p99 = scmp.eq.s32.totalorder %s20, 0
      %p100 = por %p98, %p99
      %s102 = sadd.s32 %s101, 1
      %p105 = scmp.eq.s32.totalorder %s14, 11
      %p106 = scmp.ne.s32.totalorder %s101, %s103
      %p107 = scmp.eq.s32.totalorder %s14, 0
      %p108 = por %p106, %p107
      %p109 = scmp.ne.s32.totalorder %s101, %s103
      %p110 = scmp.eq.s32.totalorder %s19, 11
      %p111 = por %p109, %p110
      %p112 = scmp.ne.s32.totalorder %s103, %s104
      %p113 = scmp.eq.s32.totalorder %s19, 0
      %p114 = por %p112, %p113
      %p115 = scmp.ne.s32.totalorder %s103, %s104
      %p116 = scmp.eq.s32.totalorder %s20, 11
      %p117 = por %p115, %p116
      %p119 = scmp.ne.s32.totalorder %s104, %s118
      %p120 = scmp.eq.s32.totalorder %s20, 0
      %p121 = por %p119, %p120
      %s123 = sadd.s32 %s122, 1
      %p126 = scmp.eq.s32.totalorder %s14, 11
      %p127 = scmp.ne.s32.totalorder %s122, %s124
      %p128 = scmp.eq.s32.totalorder %s14, 0
      %p129 = por %p127, %p128
      %p130 = scmp.ne.s32.totalorder %s122, %s124
      %p131 = scmp.eq.s32.totalorder %s19, 11
      %p132 = por %p130, %p131
      %p133 = scmp.ne.s32.totalorder %s124, %s125
      %p134 = scmp.eq.s32.totalorder %s19, 0
      %p135 = por %p133, %p134
      %p136 = scmp.ne.s32.totalorder %s124, %s125
      %p137 = scmp.eq.s32.totalorder %s20, 11
      %p138 = por %p136, %p137
      %p140 = scmp.ne.s32.totalorder %s125, %s139
      %p141 = scmp.eq.s32.totalorder %s20, 0
      %p142 = por %p140, %p141
      %s144 = sadd.s32 %s143, 1
      %p147 = scmp.eq.s32.totalorder %s14, 11
      %p148 = scmp.ne.s32.totalorder %s143, %s145
      %p149 = scmp.eq.s32.totalorder %s14, 0
      %p150 = por %p148, %p149
      %p151 = scmp.ne.s32.totalorder %s143, %s145
      %p152 = scmp.eq.s32.totalorder %s19, 11
      %p153 = por %p151, %p152
      %p154 = scmp.ne.s32.totalorder %s145, %s146
      %p155 = scmp.eq.s32.totalorder %s19, 0
      %p156 = por %p154, %p155
      %p157 = scmp.ne.s32.totalorder %s145, %s146
      %p158 = scmp.eq.s32.totalorder %s20, 11
      %p159 = por %p157, %p158
      %p161 = scmp.ne.s32.totalorder %s146, %s160
      %p162 = scmp.eq.s32.totalorder %s20, 0
      %p163 = por %p161, %p162
      %p164 = scmp.eq.s32.totalorder %s22, 2
      %s165 = scalar_select %p164, %s23, 0
      %p166 = scmp.eq.s32.totalorder %s36, 2
      %s167 = scalar_select %p166, %s32, 0
      %s168 = ssub.s32 %s21, %s40
      %s169 = ssub.s32 %s165, %s167
      %s170 = sor.u32 %s168, %s169
      %p171 = scmp.eq.s32.totalorder %s170, 0
      %s173 = sadd.s32 %s172, 1
      %s174 = scalar_select %p171, %s172, %s173
      %p177 = pneg %p171
      %p178 = scmp.eq.s32.totalorder %s14, 11
      %p179 = por %p177, %p178
      %p180 = scmp.ne.s32.totalorder %s172, %s175
      %p181 = scmp.eq.s32.totalorder %s14, 0
      %p182 = por %p180, %p181
      %p183 = scmp.ne.s32.totalorder %s172, %s175
      %p184 = scmp.eq.s32.totalorder %s19, 11
      %p185 = por %p183, %p184
      %p186 = scmp.ne.s32.totalorder %s175, %s176
      %p187 = scmp.eq.s32.totalorder %s19, 0
      %p188 = por %p186, %p187
      %p189 = scmp.ne.s32.totalorder %s175, %s176
      %p190 = scmp.eq.s32.totalorder %s20, 11
      %p191 = por %p189, %p190
      %p193 = scmp.ne.s32.totalorder %s176, %s192
      %p194 = scmp.eq.s32.totalorder %s20, 0
      %p195 = por %p193, %p194
      %p196 = scmp.le.s32.totalorder 1, %s14
      %p197 = scmp.lt.s32.totalorder %s14, 13
      %p198 = pnand %p196, %p197
      %p199 = pneg %p198
      // Predicated region
      $region9: #{tpu_custom_call.1} parent=5 // pred_check
        _
      $region10: #{tpu_custom_call.1} parent=5 // pred_check_branch
        %201 = sbr.rel (%p198) target = $region12
      $region11: #{tpu_custom_call.1} parent=5 // pred_region
        %s202 = ssub.s32 %s14, 1
        // Predicated region
        $region13: #{tpu_custom_call.1} parent=11 // pred_check
          %p203 = pneg %p114
        $region14: #{tpu_custom_call.1} parent=11 // pred_check_branch
          %205 = sbr.rel (%p203) target = $region16
        $region15: #{tpu_custom_call.1} parent=11 // pred_region
          _
        $region16: #{tpu_custom_call.1} parent=11 // pred_fallthru
          _
        // Predicated region
        $region17: #{tpu_custom_call.1} parent=11 // pred_check
          %p206 = pneg %p135
        $region18: #{tpu_custom_call.1} parent=11 // pred_check_branch
          %208 = sbr.rel (%p206) target = $region20
        $region19: #{tpu_custom_call.1} parent=11 // pred_region
          _
        $region20: #{tpu_custom_call.1} parent=11 // pred_fallthru
          _
        // Predicated region
        $region21: #{tpu_custom_call.1} parent=11 // pred_check
          %p209 = pneg %p156
        $region22: #{tpu_custom_call.1} parent=11 // pred_check_branch
          %211 = sbr.rel (%p209) target = $region24
        $region23: #{tpu_custom_call.1} parent=11 // pred_region
          _
        $region24: #{tpu_custom_call.1} parent=11 // pred_fallthru
          _
      $region12: #{tpu_custom_call.1} parent=5 // pred_fallthru
        _
      %p212 = scmp.lt.s32.totalorder %s14, 12
      // Predicated region
      $region25: #{tpu_custom_call.1} parent=5 // pred_check
        %p213 = pneg %p212
      $region26: #{tpu_custom_call.1} parent=5 // pred_check_branch
        %215 = sbr.rel (%p213) target = $region28
      $region27: #{tpu_custom_call.1} parent=5 // pred_region
        // Predicated region
        $region29: #{tpu_custom_call.1} parent=27 // pred_check
          %p216 = pneg %p55
        $region30: #{tpu_custom_call.1} parent=27 // pred_check_branch
          %218 = sbr.rel (%p216) target = $region32
        $region31: #{tpu_custom_call.1} parent=27 // pred_region
          %p219 = scmp.lt.s32.totalorder %s21, 1
          %s220 = scalar_select %p219, %s21, 1
          %p221 = scmp.lt.s32.totalorder %s23, 1
          %s222 = scalar_select %p221, %s23, 1
          %s223 = smul.addr %s220, 2
          %s224 = sadd.s32 %s222, %s223
          %s225 = smul.addr %s224, 4
          %s226 = scalar_lea.vmem %s0, %s225
        $region32: #{tpu_custom_call.1} parent=27 // pred_fallthru
          _
        // Predicated region
        $region33: #{tpu_custom_call.1} parent=27 // pred_check
          %p227 = pneg %p87
        $region34: #{tpu_custom_call.1} parent=27 // pred_check_branch
          %229 = sbr.rel (%p227) target = $region36
        $region35: #{tpu_custom_call.1} parent=27 // pred_region
          %p230 = scmp.lt.s32.totalorder %s22, 2
          %s231 = scalar_select %p230, %s23, 0
          %p232 = scmp.lt.s32.totalorder %s21, 1
          %s233 = scalar_select %p232, %s21, 1
          %p234 = scmp.lt.s32.totalorder %s231, 1
          %s235 = scalar_select %p234, %s231, 1
          %s236 = smul.addr %s233, 2
          %s237 = sadd.s32 %s235, %s236
          %s238 = smul.addr %s237, 8
          %s239 = scalar_lea.vmem %s1, %s238
          %p240 = scmp.lt.s32.totalorder %s22, 2
          %s241 = scalar_select %p240, %s23, 0
        $region36: #{tpu_custom_call.1} parent=27 // pred_fallthru
          _
      $region28: #{tpu_custom_call.1} parent=5 // pred_fallthru
        _
      %p242 = scmp.le.s32.totalorder 1, %s14
      %p243 = scmp.lt.s32.totalorder %s14, 13
      %p244 = pnand %p242, %p243
      %p245 = pneg %p244
      // Predicated region
      $region37: #{tpu_custom_call.1} parent=5 // pred_check
        _
      $region38: #{tpu_custom_call.1} parent=5 // pred_check_branch
        %247 = sbr.rel (%p244) target = $region40
      $region39: #{tpu_custom_call.1} parent=5 // pred_region
        %s248 = ssub.s32 %s14, 1
        %p249 = scmp.lt.s32.totalorder %s24, 1
        %s250 = scalar_select %p249, %s24, 1
        %p251 = scmp.lt.s32.totalorder %s26, 1
        %s252 = scalar_select %p251, %s26, 1
        %s253 = smul.addr %s250, 2
        %s254 = sadd.s32 %s252, %s253
        %s255 = smul.addr %s254, 4
        %s256 = scalar_lea.vmem %s0, %s255
        %p257 = pneg %p61
        %p258 = pneg %p58
        %p259 = scmp.lt.s32.totalorder %s25, 2
        %s260 = scalar_select %p259, %s26, 0
        %p261 = scmp.lt.s32.totalorder %s24, 1
        %s262 = scalar_select %p261, %s24, 1
        %p263 = scmp.lt.s32.totalorder %s260, 1
        %s264 = scalar_select %p263, %s260, 1
        %s265 = smul.addr %s262, 2
        %s266 = sadd.s32 %s264, %s265
        %s267 = smul.addr %s266, 8
        %s268 = scalar_lea.vmem %s1, %s267
        %p269 = pneg %p93
        %p270 = pneg %p90
        %p271 = pneg %p114
        %p272 = pneg %p111
        %p273 = pneg %p135
        %p274 = pneg %p132
        %p275 = pneg %p156
        %p276 = pneg %p153
        %p277 = pneg %p188
        %p278 = pneg %p185
        %s279 = sand.u32 %s175, 1
        %s280 = scalar_lea.sflag [#allocation10], %s279
        %s281 = sand.u32 %s175, 1
        %s282 = smul.addr %s281, 4
        %s283 = scalar_lea.vmem [#allocation9], %s282
        %p284 = scmp.lt.s32.totalorder %s24, 1
        %s285 = scalar_select %p284, %s24, 1
        %p286 = scmp.lt.s32.totalorder %s26, 1
        %s287 = scalar_select %p286, %s26, 1
        %s288 = smul.addr %s285, 2
        %s289 = sadd.s32 %s287, %s288
        %s290 = smul.addr %s289, 4
        %s291 = scalar_lea.vmem %s0, %s290
        %p292 = scmp.lt.s32.totalorder %s25, 2
        %s293 = scalar_select %p292, %s26, 0
        %p294 = scmp.lt.s32.totalorder %s24, 1
        %s295 = scalar_select %p294, %s24, 1
        %p296 = scmp.lt.s32.totalorder %s293, 1
        %s297 = scalar_select %p296, %s293, 1
        %s298 = smul.addr %s295, 2
        %s299 = sadd.s32 %s297, %s298
        %s300 = smul.addr %s299, 8
        %s301 = scalar_lea.vmem %s1, %s300
        %p302 = scmp.lt.s32.totalorder %s25, 2
        %s303 = scalar_select %p302, %s26, 0
        %p304 = scmp.eq.s32.totalorder %s25, 2
        %s305 = scalar_select %p304, %s26, 0
        %p306 = scmp.eq.s32.totalorder %s25, 0
        %p307 = scmp.eq.s32.totalorder %s26, 0
        %p308 = pnand %p306, %p307
        %p309 = pneg %p308
        // Predicated region
        $region41: #{tpu_custom_call.1} parent=39 // pred_check
          _
        $region42: #{tpu_custom_call.1} parent=39 // pred_check_branch
          %311 = sbr.rel (%p308) target = $region44
        $region43: #{tpu_custom_call.1} parent=39 // pred_region
          %vm312 = vcmask 7168
          %313 = vst.msk [vmem:[#allocation2] sm:$0xff] %vm312, 0.0
          %314 = vst.msk [vmem:[#allocation3] sm:$0xff] %vm312, 0.0
          %315 = vst.msk [vmem:[#allocation4] sm:$0xff] %vm312, 0.0
          %316 = vst.msk [vmem:[#allocation5] sm:$0xff] %vm312, 0.0
          %vm317 = vcmask 0
          %318 = vst.msk [vmem:[#allocation6] sm:$0x1] %vm317, 0.0
          %319 = vst.msk [vmem:[#allocation7] sm:$0x1] %vm317, 0.0
        $region44: #{tpu_custom_call.1} parent=39 // pred_fallthru
          _
        // Predicated region
        $region45: #{tpu_custom_call.1} parent=39 // pred_check
          %p320 = pneg %p306
        $region46: #{tpu_custom_call.1} parent=39 // pred_check_branch
          %322 = sbr.rel (%p320) target = $region48
        $region47: #{tpu_custom_call.1} parent=39 // pred_region
          %v323 = vld [vmem:[%s2] sm:$0xff]
          %v324 = vld [vmem:[%s291] sm:$0xf]
          %vm325 = vcmask 31744
          %v327 = vsel %vm325, %v323, 0
          %vm329 = vcmask 1043456
          %v331 = vsel %vm329, %v324, 0
          %333 = vmatprep.subr.mxu0 0.0
          %334 = vmatpush1.msra.mxu0 0.0
          %335 = vmatprep.subr.mxu0 0.0
          %336 = vmatpush1.msra.mxu0 0.0
          %337 = vmatprep.subr.mxu0 0.0
          %338 = vmatpush1.msra.mxu0 0.0
          %339 = vmatprep.subr.mxu0 0.0
          %340 = vmatpush1.msra.mxu0 0.0
          %341 = vmatprep.subr.mxu0 0.0
          %342 = vmatpush1.msra.mxu0 0.0
          %343 = vmatprep.subr.mxu0 0.0
          %344 = vmatpush1.msra.mxu0 0.0
          %345 = vmatprep.subr.mxu0 0.0
          %346 = vmatpush1.msra.mxu0 0.0
          %347 = vmatprep.subr.mxu0 0.0
          %348 = vmatpush1.msra.mxu0 0.0
          %349 = vmatprep.subr.mxu0 0.0
          %350 = vmatpush1.msra.mxu0 0.0
          %351 = vmatprep.subr.mxu0 0.0
          %352 = vmatpush1.msra.mxu0 0.0
          %353 = vmatprep.subr.mxu0 0.0
          %354 = vmatpush1.msra.mxu0 0.0
          %355 = vmatprep.subr.mxu0 0.0
          %356 = vmatpush1.msra.mxu0 0.0
          %357 = vmatprep.subr.mxu0 0.0
          %358 = vmatpush1.msra.mxu0 0.0
          %359 = vmatprep.subr.mxu0 0.0
          %360 = vmatpush1.msra.mxu0 0.0
          %361 = vmatprep.subr.mxu0 0.0
          %362 = vmatpush1.msra.mxu0 0.0
          %363 = vmatprep.subr.mxu0 0.0
          %364 = vmatpush1.msra.mxu0 %v331
          %365 = vmatprep.subr.mxu0 0.0
          %366 = vmatpush2.msra.mxu0 0.0
          %367 = vmatprep.subr.mxu0 0.0
          %368 = vmatpush2.msra.mxu0 0.0
          %369 = vmatprep.subr.mxu0 0.0
          %370 = vmatpush2.msra.mxu0 0.0
          %371 = vmatprep.subr.mxu0 0.0
          %372 = vmatpush2.msra.mxu0 0.0
          %373 = vmatprep.subr.mxu0 0.0
          %374 = vmatpush2.msra.mxu0 0.0
          %375 = vmatprep.subr.mxu0 0.0
          %376 = vmatpush2.msra.mxu0 0.0
          %377 = vmatprep.subr.mxu0 0.0
          %378 = vmatpush2.msra.mxu0 0.0
          %379 = vmatprep.subr.mxu0 0.0
          %380 = vmatpush2.msra.mxu0 0.0
          %381 = vmatprep.subr.mxu0 0.0
          %382 = vmatpush2.msra.mxu0 0.0
          %383 = vmatprep.subr.mxu0 0.0
          %384 = vmatpush2.msra.mxu0 0.0
          %385 = vmatprep.subr.mxu0 0.0
          %386 = vmatpush2.msra.mxu0 0.0
          %387 = vmatprep.subr.mxu0 0.0
          %388 = vmatpush2.msra.mxu0 0.0
          %389 = vmatprep.subr.mxu0 0.0
          %390 = vmatpush2.msra.mxu0 0.0
          %391 = vmatprep.subr.mxu0 0.0
          %392 = vmatpush2.msra.mxu0 0.0
          %393 = vmatprep.subr.mxu0 0.0
          %394 = vmatpush2.msra.mxu0 0.0
          %395 = vmatprep.subr.mxu0 0.0
          %396 = vmatpush2.msra.mxu0 0.0
          %397 = vmatprep.mubr.f32.mxu0 0.0
          %398 = vmatmul.mubr.f32.gmra.mxu0 %v327
          %v399 = vpop.f32.mrf.mxu0
          %v400 = vadd.f32 0.0, %v399
          %v401 = vpop.f32.mrf.mxu0
          %402 = vdwg.mxu0
          %v403 = vld [vmem:[%s3] sm:$0xff]
          %v404 = vld [vmem:[%s301] sm:$0x3f]
          %vm405 = vcmask 48128
          %v407 = vsel %vm405, %v403, 0
          %vm409 = vcmask 1045504
          %v411 = vsel %vm409, %v404, 0
          %413 = vmatprep.subr.mxu0 0.0
          %414 = vmatpush1.msra.mxu0 0.0
          %415 = vmatprep.subr.mxu0 0.0
          %416 = vmatpush1.msra.mxu0 0.0
          %417 = vmatprep.subr.mxu0 0.0
          %418 = vmatpush1.msra.mxu0 0.0
          %419 = vmatprep.subr.mxu0 0.0
          %420 = vmatpush1.msra.mxu0 0.0
          %421 = vmatprep.subr.mxu0 0.0
          %422 = vmatpush1.msra.mxu0 0.0
          %423 = vmatprep.subr.mxu0 0.0
          %424 = vmatpush1.msra.mxu0 0.0
          %425 = vmatprep.subr.mxu0 0.0
          %426 = vmatpush1.msra.mxu0 0.0
          %427 = vmatprep.subr.mxu0 0.0
          %428 = vmatpush1.msra.mxu0 0.0
          %429 = vmatprep.subr.mxu0 0.0
          %430 = vmatpush1.msra.mxu0 0.0
          %431 = vmatprep.subr.mxu0 0.0
          %432 = vmatpush1.msra.mxu0 0.0
          %433 = vmatprep.subr.mxu0 0.0
          %434 = vmatpush1.msra.mxu0 0.0
          %435 = vmatprep.subr.mxu0 0.0
          %436 = vmatpush1.msra.mxu0 0.0
          %437 = vmatprep.subr.mxu0 0.0
          %438 = vmatpush1.msra.mxu0 0.0
          %439 = vmatprep.subr.mxu0 0.0
          %440 = vmatpush1.msra.mxu0 0.0
          %441 = vmatprep.subr.mxu0 0.0
          %442 = vmatpush1.msra.mxu0 0.0
          %443 = vmatprep.subr.mxu0 0.0
          %444 = vmatpush1.msra.mxu0 %v411
          %445 = vmatprep.subr.mxu0 0.0
          %446 = vmatpush2.msra.mxu0 0.0
          %447 = vmatprep.subr.mxu0 0.0
          %448 = vmatpush2.msra.mxu0 0.0
          %449 = vmatprep.subr.mxu0 0.0
          %450 = vmatpush2.msra.mxu0 0.0
          %451 = vmatprep.subr.mxu0 0.0
          %452 = vmatpush2.msra.mxu0 0.0
          %453 = vmatprep.subr.mxu0 0.0
          %454 = vmatpush2.msra.mxu0 0.0
          %455 = vmatprep.subr.mxu0 0.0
          %456 = vmatpush2.msra.mxu0 0.0
          %457 = vmatprep.subr.mxu0 0.0
          %458 = vmatpush2.msra.mxu0 0.0
          %459 = vmatprep.subr.mxu0 0.0
          %460 = vmatpush2.msra.mxu0 0.0
          %461 = vmatprep.subr.mxu0 0.0
          %462 = vmatpush2.msra.mxu0 0.0
          %463 = vmatprep.subr.mxu0 0.0
          %464 = vmatpush2.msra.mxu0 0.0
          %465 = vmatprep.subr.mxu0 0.0
          %466 = vmatpush2.msra.mxu0 0.0
          %467 = vmatprep.subr.mxu0 0.0
          %468 = vmatpush2.msra.mxu0 0.0
          %469 = vmatprep.subr.mxu0 0.0
          %470 = vmatpush2.msra.mxu0 0.0
          %471 = vmatprep.subr.mxu0 0.0
          %472 = vmatpush2.msra.mxu0 0.0
          %473 = vmatprep.subr.mxu0 0.0
          %474 = vmatpush2.msra.mxu0 0.0
          %475 = vmatprep.subr.mxu0 0.0
          %476 = vmatpush2.msra.mxu0 0.0
          %477 = vmatprep.mubr.f32.mxu0 0.0
          %478 = vmatmul.mubr.f32.gmra.mxu0 %v407
          %v479 = vpop.f32.mrf.mxu0
          %v480 = vadd.f32 0.0, %v479
          %v481 = vpop.f32.mrf.mxu0
          %482 = vdwg.mxu0
          %v483 = vld [vmem:[#allocation2] sm:$0xff]
          %484 = vadd.xlane.f32.xlu0 %v400
          %v485 = vpop.xlane.xlu0 %484
          %v486 = vadd.f32 %v483, %v485
          %vm487 = vcmask 7168
          %488 = vst.msk [vmem:[#allocation2] sm:$0xff] %vm487, %v486
          %v489 = vld [vmem:[#allocation3] sm:$0xff]
          %v490 = vmul.f32 %v400, %v400
          %491 = vadd.xlane.f32.xlu0 %v490
          %v492 = vpop.xlane.xlu0 %491
          %v493 = vadd.f32 %v489, %v492
          %494 = vst.msk [vmem:[#allocation3] sm:$0xff] %vm487, %v493
          %v495 = vld [vmem:[#allocation4] sm:$0xff]
          %496 = vadd.xlane.f32.xlu0 %v480
          %v497 = vpop.xlane.xlu0 %496
          %v498 = vadd.f32 %v495, %v497
          %499 = vst.msk [vmem:[#allocation4] sm:$0xff] %vm487, %v498
          %v500 = vld [vmem:[#allocation5] sm:$0xff]
          %v501 = vmul.f32 %v480, %v480
          %502 = vadd.xlane.f32.xlu0 %v501
          %v503 = vpop.xlane.xlu0 %502
          %v504 = vadd.f32 %v500, %v503
          %505 = vst.msk [vmem:[#allocation5] sm:$0xff] %vm487, %v504
        $region48: #{tpu_custom_call.1} parent=39 // pred_fallthru
          _
        %p506 = scmp.eq.s32.totalorder %s25, 1
        // Predicated region
        $region49: #{tpu_custom_call.1} parent=39 // pred_check
          %p507 = pneg %p506
        $region50: #{tpu_custom_call.1} parent=39 // pred_check_branch
          %509 = sbr.rel (%p507) target = $region52
        $region51: #{tpu_custom_call.1} parent=39 // pred_region
          %v510 = vld [vmem:[%s2] sm:$0xff]
          %v511 = vld [vmem:[%s291] sm:$0xf]
          %vm512 = vcmask 31744
          %v514 = vsel %vm512, %v510, 0
          %vm516 = vcmask 1043456
          %v518 = vsel %vm516, %v511, 0
          %520 = vmatprep.subr.mxu0 0.0
          %521 = vmatpush1.msra.mxu0 0.0
          %522 = vmatprep.subr.mxu0 0.0
          %523 = vmatpush1.msra.mxu0 0.0
          %524 = vmatprep.subr.mxu0 0.0
          %525 = vmatpush1.msra.mxu0 0.0
          %526 = vmatprep.subr.mxu0 0.0
          %527 = vmatpush1.msra.mxu0 0.0
          %528 = vmatprep.subr.mxu0 0.0
          %529 = vmatpush1.msra.mxu0 0.0
          %530 = vmatprep.subr.mxu0 0.0
          %531 = vmatpush1.msra.mxu0 0.0
          %532 = vmatprep.subr.mxu0 0.0
          %533 = vmatpush1.msra.mxu0 0.0
          %534 = vmatprep.subr.mxu0 0.0
          %535 = vmatpush1.msra.mxu0 0.0
          %536 = vmatprep.subr.mxu0 0.0
          %537 = vmatpush1.msra.mxu0 0.0
          %538 = vmatprep.subr.mxu0 0.0
          %539 = vmatpush1.msra.mxu0 0.0
          %540 = vmatprep.subr.mxu0 0.0
          %541 = vmatpush1.msra.mxu0 0.0
          %542 = vmatprep.subr.mxu0 0.0
          %543 = vmatpush1.msra.mxu0 0.0
          %544 = vmatprep.subr.mxu0 0.0
          %545 = vmatpush1.msra.mxu0 0.0
          %546 = vmatprep.subr.mxu0 0.0
          %547 = vmatpush1.msra.mxu0 0.0
          %548 = vmatprep.subr.mxu0 0.0
          %549 = vmatpush1.msra.mxu0 0.0
          %550 = vmatprep.subr.mxu0 0.0
          %551 = vmatpush1.msra.mxu0 %v518
          %552 = vmatprep.subr.mxu0 0.0
          %553 = vmatpush2.msra.mxu0 0.0
          %554 = vmatprep.subr.mxu0 0.0
          %555 = vmatpush2.msra.mxu0 0.0
          %556 = vmatprep.subr.mxu0 0.0
          %557 = vmatpush2.msra.mxu0 0.0
          %558 = vmatprep.subr.mxu0 0.0
          %559 = vmatpush2.msra.mxu0 0.0
          %560 = vmatprep.subr.mxu0 0.0
          %561 = vmatpush2.msra.mxu0 0.0
          %562 = vmatprep.subr.mxu0 0.0
          %563 = vmatpush2.msra.mxu0 0.0
          %564 = vmatprep.subr.mxu0 0.0
          %565 = vmatpush2.msra.mxu0 0.0
          %566 = vmatprep.subr.mxu0 0.0
          %567 = vmatpush2.msra.mxu0 0.0
          %568 = vmatprep.subr.mxu0 0.0
          %569 = vmatpush2.msra.mxu0 0.0
          %570 = vmatprep.subr.mxu0 0.0
          %571 = vmatpush2.msra.mxu0 0.0
          %572 = vmatprep.subr.mxu0 0.0
          %573 = vmatpush2.msra.mxu0 0.0
          %574 = vmatprep.subr.mxu0 0.0
          %575 = vmatpush2.msra.mxu0 0.0
          %576 = vmatprep.subr.mxu0 0.0
          %577 = vmatpush2.msra.mxu0 0.0
          %578 = vmatprep.subr.mxu0 0.0
          %579 = vmatpush2.msra.mxu0 0.0
          %580 = vmatprep.subr.mxu0 0.0
          %581 = vmatpush2.msra.mxu0 0.0
          %582 = vmatprep.subr.mxu0 0.0
          %583 = vmatpush2.msra.mxu0 0.0
          %584 = vmatprep.mubr.f32.mxu0 0.0
          %585 = vmatmul.mubr.f32.gmra.mxu0 %v514
          %v586 = vpop.f32.mrf.mxu0
          %v587 = vadd.f32 0.0, %v586
          %v588 = vpop.f32.mrf.mxu0
          %589 = vdwg.mxu0
          %v590 = vld [vmem:[%s3] sm:$0xff]
          %v591 = vld [vmem:[%s301] sm:$0x3f]
          %vm592 = vcmask 48128
          %v594 = vsel %vm592, %v590, 0
          %vm596 = vcmask 1045504
          %v598 = vsel %vm596, %v591, 0
          %600 = vmatprep.subr.mxu0 0.0
          %601 = vmatpush1.msra.mxu0 0.0
          %602 = vmatprep.subr.mxu0 0.0
          %603 = vmatpush1.msra.mxu0 0.0
          %604 = vmatprep.subr.mxu0 0.0
          %605 = vmatpush1.msra.mxu0 0.0
          %606 = vmatprep.subr.mxu0 0.0
          %607 = vmatpush1.msra.mxu0 0.0
          %608 = vmatprep.subr.mxu0 0.0
          %609 = vmatpush1.msra.mxu0 0.0
          %610 = vmatprep.subr.mxu0 0.0
          %611 = vmatpush1.msra.mxu0 0.0
          %612 = vmatprep.subr.mxu0 0.0
          %613 = vmatpush1.msra.mxu0 0.0
          %614 = vmatprep.subr.mxu0 0.0
          %615 = vmatpush1.msra.mxu0 0.0
          %616 = vmatprep.subr.mxu0 0.0
          %617 = vmatpush1.msra.mxu0 0.0
          %618 = vmatprep.subr.mxu0 0.0
          %619 = vmatpush1.msra.mxu0 0.0
          %620 = vmatprep.subr.mxu0 0.0
          %621 = vmatpush1.msra.mxu0 0.0
          %622 = vmatprep.subr.mxu0 0.0
          %623 = vmatpush1.msra.mxu0 0.0
          %624 = vmatprep.subr.mxu0 0.0
          %625 = vmatpush1.msra.mxu0 0.0
          %626 = vmatprep.subr.mxu0 0.0
          %627 = vmatpush1.msra.mxu0 0.0
          %628 = vmatprep.subr.mxu0 0.0
          %629 = vmatpush1.msra.mxu0 0.0
          %630 = vmatprep.subr.mxu0 0.0
          %631 = vmatpush1.msra.mxu0 %v598
          %632 = vmatprep.subr.mxu0 0.0
          %633 = vmatpush2.msra.mxu0 0.0
          %634 = vmatprep.subr.mxu0 0.0
          %635 = vmatpush2.msra.mxu0 0.0
          %636 = vmatprep.subr.mxu0 0.0
          %637 = vmatpush2.msra.mxu0 0.0
          %638 = vmatprep.subr.mxu0 0.0
          %639 = vmatpush2.msra.mxu0 0.0
          %640 = vmatprep.subr.mxu0 0.0
          %641 = vmatpush2.msra.mxu0 0.0
          %642 = vmatprep.subr.mxu0 0.0
          %643 = vmatpush2.msra.mxu0 0.0
          %644 = vmatprep.subr.mxu0 0.0
          %645 = vmatpush2.msra.mxu0 0.0
          %646 = vmatprep.subr.mxu0 0.0
          %647 = vmatpush2.msra.mxu0 0.0
          %648 = vmatprep.subr.mxu0 0.0
          %649 = vmatpush2.msra.mxu0 0.0
          %650 = vmatprep.subr.mxu0 0.0
          %651 = vmatpush2.msra.mxu0 0.0
          %652 = vmatprep.subr.mxu0 0.0
          %653 = vmatpush2.msra.mxu0 0.0
          %654 = vmatprep.subr.mxu0 0.0
          %655 = vmatpush2.msra.mxu0 0.0
          %656 = vmatprep.subr.mxu0 0.0
          %657 = vmatpush2.msra.mxu0 0.0
          %658 = vmatprep.subr.mxu0 0.0
          %659 = vmatpush2.msra.mxu0 0.0
          %660 = vmatprep.subr.mxu0 0.0
          %661 = vmatpush2.msra.mxu0 0.0
          %662 = vmatprep.subr.mxu0 0.0
          %663 = vmatpush2.msra.mxu0 0.0
          %664 = vmatprep.mubr.f32.mxu0 0.0
          %665 = vmatmul.mubr.f32.gmra.mxu0 %v594
          %v666 = vpop.f32.mrf.mxu0
          %v667 = vadd.f32 0.0, %v666
          %v668 = vpop.f32.mrf.mxu0
          %669 = vdwg.mxu0
          %v670 = vld [vmem:[#allocation2] sm:$0xff]
          %v671 = vmul.f32 %v670, 0.00390625
          %v672 = vld [vmem:[#allocation3] sm:$0xff]
          %v673 = vmul.f32 %v672, 0.00390625
          %v674 = vmul.f32 %v671, %v671
          %v675 = vsub.f32 %v673, %v674
          %v676 = vmax.f32 %v675, 0.0
          %v677 = vld [vmem:[#allocation4] sm:$0xff]
          %v678 = vmul.f32 %v677, 0.00390625
          %v679 = vld [vmem:[#allocation5] sm:$0xff]
          %v680 = vmul.f32 %v679, 0.00390625
          %v681 = vmul.f32 %v678, %v678
          %v682 = vsub.f32 %v680, %v681
          %v683 = vmax.f32 %v682, 0.0
          %685 = vset.pattern.permute.xlu0 0
          %686 = vperm.xlu0 %685, %v671
          %v687 = vpop.permute.xlu0 %686
          %v689 = vsub.f32 %v587, %v687
          %v690 = vadd.f32 %v676, 1e-05
          %v691 = vrsqrt.pop %v690
          %693 = vset.pattern.permute.xlu0 0
          %694 = vperm.xlu0 %693, %v691
          %v695 = vpop.permute.xlu0 %694
          %v697 = vmul.f32 %v689, %v695
          %699 = vset.pattern.permute.xlu0 0
          %700 = vperm.xlu0 %699, %v678
          %v701 = vpop.permute.xlu0 %700
          %v703 = vsub.f32 %v667, %v701
          %v704 = vadd.f32 %v683, 1e-05
          %v705 = vrsqrt.pop %v704
          %707 = vset.pattern.permute.xlu0 0
          %708 = vperm.xlu0 %707, %v705
          %v709 = vpop.permute.xlu0 %708
          %v711 = vmul.f32 %v703, %v709
          %v712 = vadd.f32 %v697, %v711
          %v713 = vmax.f32 %v712, 0.0
          %v714 = vld [vmem:[%s4] sm:$0xff]
          %716 = vset.pattern.permute.xlu0 0
          %717 = vperm.xlu0 %716, %v714
          %v718 = vpop.permute.xlu0 %717
          %v720 = vmul.f32 %v713, %v718
          %v721 = vrot.slane %v720, 4
          %v722 = vadd.f32 %v720, %v721
          %v723 = vrot.slane %v722, 2
          %v724 = vadd.f32 %v722, %v723
          %v725 = vrot.slane %v724, 1
          %v726 = vadd.f32 %v724, %v725
          %s727 = scalar_lea.vmem [#allocation8], %s26
          %728 = vst [vmem:[%s727] sm:$0x1] %v726
          %v729 = vld [vmem:[#allocation6] sm:$0x1]
          %730 = vadd.xlane.f32.xlu0 %v726
          %v731 = vpop.xlane.xlu0 %730
          %v732 = vadd.f32 %v729, %v731
          %vm733 = vcmask 0
          %734 = vst.msk [vmem:[#allocation6] sm:$0x1] %vm733, %v732
          %v735 = vld [vmem:[#allocation7] sm:$0x1]
          %v736 = vmul.f32 %v726, %v726
          %737 = vadd.xlane.f32.xlu0 %v736
          %v738 = vpop.xlane.xlu0 %737
          %v739 = vadd.f32 %v735, %v738
          %740 = vst.msk [vmem:[#allocation7] sm:$0x1] %vm733, %v739
        $region52: #{tpu_custom_call.1} parent=39 // pred_fallthru
          _
        %p741 = scmp.eq.s32.totalorder %s25, 2
        // Predicated region
        $region53: #{tpu_custom_call.1} parent=39 // pred_check
          %p742 = pneg %p741
        $region54: #{tpu_custom_call.1} parent=39 // pred_check_branch
          %744 = sbr.rel (%p742) target = $region56
        $region55: #{tpu_custom_call.1} parent=39 // pred_region
          %v745 = vld [vmem:[#allocation6] sm:$0x1]
          %v746 = vmul.f32 %v745, 0.00390625
          %v747 = vld [vmem:[#allocation7] sm:$0x1]
          %v748 = vmul.f32 %v747, 0.00390625
          %v749 = vmul.f32 %v746, %v746
          %v750 = vsub.f32 %v748, %v749
          %v751 = vmax.f32 %v750, 0.0
          %s752 = scalar_lea.vmem [#allocation8], %s26
          %v753 = vld [vmem:[%s752] sm:$0x1]
          %755 = vset.pattern.permute.xlu0 0
          %756 = vperm.xlu0 %755, %v746
          %v757 = vpop.permute.xlu0 %756
          %v759 = vlaneseq
          %v760 = vshrl.u32 %v759, 7
          %v761 = vsub.s32 0, %v760
          %v762 = vrot.slane %v757, %v761
          %v763 = vsub.f32 %v753, %v762
          %v764 = vadd.f32 %v751, 1e-05
          %v765 = vrsqrt.pop %v764
          %767 = vset.pattern.permute.xlu0 0
          %768 = vperm.xlu0 %767, %v765
          %v769 = vpop.permute.xlu0 %768
          %v771 = vlaneseq
          %v772 = vshrl.u32 %v771, 7
          %v773 = vsub.s32 0, %v772
          %v774 = vrot.slane %v769, %v773
          %v775 = vmul.f32 %v763, %v774
          %v776 = vxor.u32 %v775, 2147483648
          %v777 = vmul.f32 %v776, 1.442695
          %v778 = vpow.pop %v777
          %v779 = vadd.f32 %v778, 1.0
          %v780 = vrcp.pop %v779
          %v781 = vmul.f32 1.0, %v780
          %v782 = vld [vmem:[%s291] sm:$0xf]
          %v784 = vlaneseq
          %v785 = vshrl.u32 %v784, 7
          %v786 = vsub.s32 0, %v785
          %v787 = vrot.slane %v781, %v786
          %v789 = vmul.f32 %v782, %v787
          %790 = vst [vmem:[%s283] sm:$0xf] %v789
        $region56: #{tpu_custom_call.1} parent=39 // pred_fallthru
          _
        %s791 = sand.u32 %s175, 1
        %s792 = scalar_lea.sflag [#allocation10], %s791
        %s793 = sand.u32 %s175, 1
        %s794 = smul.addr %s793, 4
        %s795 = scalar_lea.vmem [#allocation9], %s794
        // Predicated region
        $region57: #{tpu_custom_call.1} parent=39 // pred_check
          %p796 = pneg %p185
        $region58: #{tpu_custom_call.1} parent=39 // pred_check_branch
          %798 = sbr.rel (%p796) target = $region60
        $region59: #{tpu_custom_call.1} parent=39 // pred_region
          %p799 = scmp.eq.s32.totalorder %s25, 2
          %s800 = scalar_select %p799, %s26, 0
          %s802 = ssub.s32 64, 64
          %803 = vsyncadd %s792, %s802
          %s804 = smul.addr %s24, 2
          %s805 = sadd.s32 %s800, %s804
          %s806 = smul.addr %s805, 64
          %s807 = scalar_lea.hbm %s5, %s806
          %s809 = sshll.u32 %s795, 4
          %s810 = int_to_ptr.vmem [resolvable:$true] %s809
          %812 = dma.vmem_to_hbm [thread:$0]  %s810, 64, %s807, %s792
        $region60: #{tpu_custom_call.1} parent=39 // pred_fallthru
          _
      $region40: #{tpu_custom_call.1} parent=5 // pred_fallthru
        _
      %p813 = scmp.le.s32.totalorder 2, %s14
      // Predicated region
      $region61: #{tpu_custom_call.1} parent=5 // pred_check
        %p814 = pneg %p813
      $region62: #{tpu_custom_call.1} parent=5 // pred_check_branch
        %816 = sbr.rel (%p814) target = $region64
      $region63: #{tpu_custom_call.1} parent=5 // pred_region
        %s817 = ssub.s32 %s14, 2
        // Predicated region
        $region65: #{tpu_custom_call.1} parent=63 // pred_check
          %p818 = pneg %p191
        $region66: #{tpu_custom_call.1} parent=63 // pred_check_branch
          %820 = sbr.rel (%p818) target = $region68
        $region67: #{tpu_custom_call.1} parent=63 // pred_region
          %s821 = sand.u32 %s176, 1
          %s822 = scalar_lea.sflag [#allocation10], %s821
          %s823 = sand.u32 %s176, 1
          %s824 = smul.addr %s823, 4
          %s825 = scalar_lea.vmem [#allocation9], %s824
          %826 = dma.done %s822, 64
        $region68: #{tpu_custom_call.1} parent=63 // pred_fallthru
          _
      $region64: #{tpu_custom_call.1} parent=5 // pred_fallthru
        _
    $region6: #{tpu_custom_call.1} parent=1 // loop_footer
      %s18 = sadd.s32 1, %s14
    $region7: #{tpu_custom_call.1} parent=1 // loop_footer_branch
      %13 = sbr.rel target = $region3
    $region8: #{tpu_custom_call.1} parent=1 // loop_exit
      _
    %827 = vsyncpa [#allocation10], 1
    %s828 = scalar_lea.sflag [#allocation10], 1
    %829 = vsyncpa %s828, 1

</llo_original>
